<compile_context>
chip_gen: v5e
topology: v5e:2x2
jax: 0.10.0
libtpu: 0.0.40
codegen_flags: <defaults>
</compile_context>

<pallas_src>
import functools

import jax
import jax.numpy as jnp
from jax.experimental import pallas as pl
from jax.experimental.pallas import tpu as pltpu

LANE = 128        # vreg lane width
SUBLANE = 8       # f32 sublane count
MAX_TB = 512      # max rows per batch tile
N_STEPS_TARGET = 4  # aim for >= 4 grid steps when the batch is large enough


def _round_up(n, m):
    return ((n + m - 1) // m) * m


def encoder_kernel(x_ref, w1_ref, b1_ref, wh_ref, bh_ref, out_ref):
    # In-kernel cast: x arrives as f32 from HBM, cast to bf16 for the MXU.
    x = x_ref[...].astype(jnp.bfloat16)                       # (TB, D)

    # h = relu(x @ W1 + b1)  — bf16 operands, f32 accumulation on the MXU.
    h = jnp.dot(x, w1_ref[...], preferred_element_type=jnp.float32)
    h = jnp.maximum(h + b1_ref[...], 0.0)                     # (TB, Hp) + (1, Hp), f32

    # Fused heads: [mu | logvar] = h @ [Wmu | Wlv] + [bmu | blv]
    y = jnp.dot(h.astype(wh_ref.dtype), wh_ref[...],
                preferred_element_type=jnp.float32)
    out_ref[...] = (y + bh_ref[...]).astype(out_ref.dtype)    # lane-dense store


def pack_params(params):
    """One-time weight packing (run at init, NOT per forward).

    Returns (packed_arrays, latent_dim). Weights are stored (in, out) so each
    layer is x @ W + b; mu/logvar heads are fused into one (H, 2L) matrix and
    all matmul operands are zero-padded to lane (128) multiples and cast to
    bf16. Biases stay f32.
    """
    w1, b1 = params["w1"], params["b1"]          # (D, H), (H,)
    wmu, bmu = params["wmu"], params["bmu"]      # (H, L), (L,)
    wlv, blv = params["wlv"], params["blv"]      # (H, L), (L,)
    D, H = w1.shape
    L = wmu.shape[1]

    Hp = _round_up(H, LANE)
    Np = _round_up(2 * L, LANE)

    w1p = jnp.zeros((D, Hp), jnp.bfloat16).at[:, :H].set(w1.astype(jnp.bfloat16))
    b1p = jnp.zeros((1, Hp), jnp.float32).at[:, :H].set(b1.reshape(1, H))

    wh = jnp.concatenate([wmu, wlv], axis=1)     # (H, 2L)  fused heads
    bh = jnp.concatenate([bmu, blv], axis=0)     # (2L,)
    whp = jnp.zeros((Hp, Np), jnp.bfloat16).at[:H, :2 * L].set(wh.astype(jnp.bfloat16))
    bhp = jnp.zeros((1, Np), jnp.float32).at[:, :2 * L].set(bh.reshape(1, 2 * L))

    packed = {"w1p": w1p, "b1p": b1p, "whp": whp, "bhp": bhp}
    return packed, L


@functools.partial(jax.jit, static_argnames=("latent_dim", "out_dtype"))
def encoder_forward(x, packed, *, latent_dim, out_dtype=jnp.float32):
    """x: (B, input_dim) f32. packed: output of pack_params (pre-padded bf16
    weights + f32 biases). Returns (mu, logvar), each (B, latent_dim)."""
    B, D = x.shape
    w1p, b1p = packed["w1p"], packed["b1p"]
    whp, bhp = packed["whp"], packed["bhp"]
    Hp = w1p.shape[1]
    Np = whp.shape[1]
    L = latent_dim

    # Batch tiling: single un-padded step for tiny batches; >= N_STEPS_TARGET
    # steps (capped at MAX_TB rows) for large batches so DMA/compute pipeline
    # and the v7x megacore ("parallel" axis) both have work.
    Bp = _round_up(B, SUBLANE)
    if Bp <= SUBLANE * N_STEPS_TARGET:
        TB = Bp
    else:
        TB = min(MAX_TB, _round_up(pl.cdiv(Bp, N_STEPS_TARGET), SUBLANE))
    Bp = _round_up(Bp, TB)

    # x stays f32 (cast to bf16 inside the kernel); pad rows only if needed.
    xp = x if Bp == B else jnp.pad(x, ((0, Bp - B), (0, 0)))

    # NOTE: if D < 128 (demo D=32) the x tile fills only D of 128 lanes of the
    # first matmul's K-feed; acceptable here, pad D in pack_params for
    # genuinely-small production D.
    grid = (Bp // TB,)
    out = pl.pallas_call(
        encoder_kernel,
        out_shape=jax.ShapeDtypeStruct((Bp, Np), out_dtype),
        grid=grid,
        in_specs=[
            pl.BlockSpec((TB, D), lambda i: (i, 0)),    # x tile (pipelined over B)
            pl.BlockSpec((D, Hp), lambda i: (0, 0)),    # W1        (resident)
            pl.BlockSpec((1, Hp), lambda i: (0, 0)),    # b1        (resident)
            pl.BlockSpec((Hp, Np), lambda i: (0, 0)),   # [Wmu|Wlv] (resident)
            pl.BlockSpec((1, Np), lambda i: (0, 0)),    # [bmu|blv] (resident)
        ],
        out_specs=pl.BlockSpec((TB, Np), lambda i: (i, 0)),
        compiler_params=pltpu.CompilerParams(
            dimension_semantics=("parallel",),
        ),
    )(xp, w1p, b1p, whp, bhp)

    mu = out[:B, :L]
    logvar = out[:B, L:2 * L]
    return mu, logvar


def init_params(key, input_dim, hidden_dim, latent_dim):
    """Deterministic synthetic init (mimics nn.Linear uniform(-1/sqrt(in), 1/sqrt(in)))."""
    k1, k2, k3, k4, k5, k6 = jax.random.split(key, 6)

    def linear(kw, kb, fan_in, fan_out):
        bound = 1.0 / jnp.sqrt(fan_in)
        w = jax.random.uniform(kw, (fan_in, fan_out), jnp.float32, -bound, bound)
        b = jax.random.uniform(kb, (fan_out,), jnp.float32, -bound, bound)
        return w, b

    w1, b1 = linear(k1, k2, input_dim, hidden_dim)
    wmu, bmu = linear(k3, k4, hidden_dim, latent_dim)
    wlv, blv = linear(k5, k6, hidden_dim, latent_dim)
    return {"w1": w1, "b1": b1, "wmu": wmu, "bmu": bmu, "wlv": wlv, "blv": blv}


if __name__ == "__main__":
    input_dim, hidden_dim, latent_dim = 32, 64, 16
    batch = 8

    key = jax.random.PRNGKey(0)
    kx, kp = jax.random.split(key)
    x = jax.random.normal(kx, (batch, input_dim), jnp.float32)
    params = init_params(kp, input_dim, hidden_dim, latent_dim)

    # One-time packing (hoisted out of the per-call path).
    packed, L = pack_params(params)
    packed = jax.block_until_ready(packed)

    mu, logvar = encoder_forward(x, packed, latent_dim=L)
    jax.block_until_ready((mu, logvar))

    # Reference with matched precision (bf16 operands, f32 accumulation) —
    # tolerance loosened vs. pure-f32 because matmul operands are bf16.
    xb = x.astype(jnp.bfloat16)
    w1b = params["w1"].astype(jnp.bfloat16)
    h_ref = jnp.maximum(
        jnp.dot(xb, w1b, preferred_element_type=jnp.float32) + params["b1"], 0.0)
    hb = h_ref.astype(jnp.bfloat16)
    mu_ref = jnp.dot(hb, params["wmu"].astype(jnp.bfloat16),
                     preferred_element_type=jnp.float32) + params["bmu"]
    lv_ref = jnp.dot(hb, params["wlv"].astype(jnp.bfloat16),
                     preferred_element_type=jnp.float32) + params["blv"]

    assert mu.shape == (batch, latent_dim) and logvar.shape == (batch, latent_dim)
    assert mu.dtype == jnp.float32 and logvar.dtype == jnp.float32
    assert jnp.allclose(mu, mu_ref, atol=1e-2, rtol=1e-2), "mu mismatch"
    assert jnp.allclose(logvar, lv_ref, atol=1e-2, rtol=1e-2), "logvar mismatch"

    print("KERNEL_OK")
</pallas_src>

<mosaic_0001>
module attributes {stable_mosaic.version = 11 : i64} {
  func.func @encoder_kernel(%arg0: i32, %arg1: memref<8x32xf32, #tpu.memory_space<vmem>>, %arg2: memref<32x128xbf16, #tpu.memory_space<vmem>>, %arg3: memref<1x128xf32, #tpu.memory_space<vmem>>, %arg4: memref<128x128xbf16, #tpu.memory_space<vmem>>, %arg5: memref<1x128xf32, #tpu.memory_space<vmem>>, %arg6: memref<8x128xf32, #tpu.memory_space<vmem>>) attributes {dimension_semantics = [#tpu.dimension_semantics<parallel>], iteration_bounds = array<i64: 1>, scalar_prefetch = 0 : i64, scratch_operands = 0 : i64, tpu.core_type = #tpu.core_type<tc>, window_params = [{transform_indices = @transform_0, window_bounds = array<i64: 8, 32>}, {pipeline_mode = #tpu.pipeline_mode<synchronous>, transform_indices = @transform_1, window_bounds = array<i64: 32, 128>}, {pipeline_mode = #tpu.pipeline_mode<synchronous>, transform_indices = @transform_2, window_bounds = array<i64: 1, 128>}, {pipeline_mode = #tpu.pipeline_mode<synchronous>, transform_indices = @transform_3, window_bounds = array<i64: 128, 128>}, {pipeline_mode = #tpu.pipeline_mode<synchronous>, transform_indices = @transform_4, window_bounds = array<i64: 1, 128>}, {transform_indices = @transform_5, window_bounds = array<i64: 8, 128>}]} {
    %c0 = arith.constant 0 : index
    %c0_0 = arith.constant 0 : index
    %0 = vector.load %arg1[%c0, %c0_0] : memref<8x32xf32, #tpu.memory_space<vmem>>, vector<8x32xf32>
    %1 = arith.truncf %0 : vector<8x32xf32> to vector<8x32xbf16>
    %c0_1 = arith.constant 0 : index
    %c0_2 = arith.constant 0 : index
    %2 = vector.load %arg2[%c0_1, %c0_2] : memref<32x128xbf16, #tpu.memory_space<vmem>>, vector<32x128xbf16>
    %cst = arith.constant dense<0.000000e+00> : vector<8x128xf32>
    %3 = tpu.matmul %1, %2, %cst {dimension_numbers = #tpu.dot_dimension_numbers<[1], [0], [0], [1], [0, 0, 1, 1], [], []>} : vector<8x32xbf16>, vector<32x128xbf16>, vector<8x128xf32> -> vector<8x128xf32>
    %c0_3 = arith.constant 0 : index
    %c0_4 = arith.constant 0 : index
    %4 = vector.load %arg3[%c0_3, %c0_4] : memref<1x128xf32, #tpu.memory_space<vmem>>, vector<1x128xf32>
    %5 = vector.broadcast %4 : vector<1x128xf32> to vector<8x128xf32>
    %6 = arith.addf %3, %5 : vector<8x128xf32>
    %cst_5 = arith.constant 0.000000e+00 : f32
    %7 = vector.broadcast %cst_5 : f32 to vector<8x128xf32>
    %8 = arith.maximumf %6, %7 : vector<8x128xf32>
    %9 = arith.truncf %8 : vector<8x128xf32> to vector<8x128xbf16>
    %c0_6 = arith.constant 0 : index
    %c0_7 = arith.constant 0 : index
    %10 = vector.load %arg4[%c0_6, %c0_7] : memref<128x128xbf16, #tpu.memory_space<vmem>>, vector<128x128xbf16>
    %cst_8 = arith.constant dense<0.000000e+00> : vector<8x128xf32>
    %11 = tpu.matmul %9, %10, %cst_8 {dimension_numbers = #tpu.dot_dimension_numbers<[1], [0], [0], [1], [0, 0, 1, 1], [], []>} : vector<8x128xbf16>, vector<128x128xbf16>, vector<8x128xf32> -> vector<8x128xf32>
    %c0_9 = arith.constant 0 : index
    %c0_10 = arith.constant 0 : index
    %12 = vector.load %arg5[%c0_9, %c0_10] : memref<1x128xf32, #tpu.memory_space<vmem>>, vector<1x128xf32>
    %13 = vector.broadcast %12 : vector<1x128xf32> to vector<8x128xf32>
    %14 = arith.addf %11, %13 : vector<8x128xf32>
    %c0_11 = arith.constant 0 : index
    %c0_12 = arith.constant 0 : index
    %15 = vector.load %arg6[%c0_11, %c0_12] : memref<8x128xf32, #tpu.memory_space<vmem>>, vector<8x128xf32>
    tpu.vector_store %arg6[%c0_11, %c0_12], %14 {strides = array<i32>} : memref<8x128xf32, #tpu.memory_space<vmem>>, vector<8x128xf32>,
    return
  }
  func.func @transform_0(%arg0: i32) -> (i32, i32) {
    %c0_i32 = arith.constant 0 : i32
    %c0_i32_0 = arith.constant 0 : i32
    return %arg0, %c0_i32 : i32, i32
  }
  func.func @transform_1(%arg0: i32) -> (i32, i32) {
    %c0_i32 = arith.constant 0 : i32
    %c0_i32_0 = arith.constant 0 : i32
    %c0_i32_1 = arith.constant 0 : i32
    return %c0_i32, %c0_i32_0 : i32, i32
  }
  func.func @transform_2(%arg0: i32) -> (i32, i32) {
    %c0_i32 = arith.constant 0 : i32
    %c0_i32_0 = arith.constant 0 : i32
    %c0_i32_1 = arith.constant 0 : i32
    return %c0_i32, %c0_i32_0 : i32, i32
  }
  func.func @transform_3(%arg0: i32) -> (i32, i32) {
    %c0_i32 = arith.constant 0 : i32
    %c0_i32_0 = arith.constant 0 : i32
    %c0_i32_1 = arith.constant 0 : i32
    return %c0_i32, %c0_i32_0 : i32, i32
  }
  func.func @transform_4(%arg0: i32) -> (i32, i32) {
    %c0_i32 = arith.constant 0 : i32
    %c0_i32_0 = arith.constant 0 : i32
    %c0_i32_1 = arith.constant 0 : i32
    return %c0_i32, %c0_i32_0 : i32, i32
  }
  func.func @transform_5(%arg0: i32) -> (i32, i32) {
    %c0_i32 = arith.constant 0 : i32
    %c0_i32_0 = arith.constant 0 : i32
    return %arg0, %c0_i32 : i32, i32
  }
}

</mosaic_0001>

<llo_original>
// kernel: encoder_forward.1
$region0: #{encoder_forward.1}
  #allocation0 [shape = 'u32[]', space=smem, size = 0x4, offset = 0x4, fixed_abs, tag = 'smem constant byte address 0x4 - core index']
  #allocation1 [shape = 'u32[72,128]{1,0:T(1,128)}', space=vmem, size = 0x9000, scoped, tag = 'internal scratch']
  %s0 = inlined_call_operand.hbm [shape: f32[8,32], index: 0, kind: input, shape index: {}]
  %s1 = inlined_call_operand.hbm [shape: bf16[32,128], index: 1, kind: input, shape index: {}]
  %s2 = inlined_call_operand.hbm [shape: f32[1,128], index: 2, kind: input, shape index: {}]
  %s3 = inlined_call_operand.hbm [shape: bf16[128,128], index: 3, kind: input, shape index: {}]
  %s4 = inlined_call_operand.vmem [shape: f32[1,128], index: 4, kind: input, shape index: {}]
  %s5 = inlined_call_operand.vmem [shape: f32[8,128], index: 5, kind: output, shape index: {}]
  %s6 = sld [smem:[#allocation0]]
  $region46: #{encoder_forward.1} parent=0
    _
  %s8 = ssub.s32 1, %s6
  %s9 = scalar_select 0, %s8, %s6
  $region1: #{encoder_forward.1} parent=0
    #allocation2 [shape = 'u8[4096]{0}', space=vmem, size = 0x1000, scoped, tag = 'input window, operand 0, single buffered']
    #allocation3 [shape = 's32[1]{0}', space=sflag, size = 0x4, scoped, tag = 'scoped memory for encoder_forward.1']
    #allocation4 [shape = 'u8[8192]{0}', space=vmem, size = 0x2000, scoped, tag = 'input window, operand 1, single buffered']
    #allocation5 [shape = 's32[1]{0}', space=sflag, size = 0x4, scoped, tag = 'scoped memory for encoder_forward.1']
    #allocation6 [shape = 'u8[512]{0}', space=vmem, size = 0x400, scoped, tag = 'input window, operand 2, single buffered']
    #allocation7 [shape = 'u8[32768]{0}', space=vmem, size = 0x8000, scoped, tag = 'input window, operand 3, single buffered']
    #allocation8 [shape = 's32[1]{0}', space=sflag, size = 0x4, scoped, tag = 'scoped memory for encoder_forward.1']
    %10 = vsyncpa [#allocation3], 0
    %11 = vsyncpa [#allocation5], 0
    %12 = vsyncpa [#allocation8], 0
    // Predicated region
    $region2: #{encoder_forward.1} parent=1 // pred_check
      _
    $region3: #{encoder_forward.1} parent=1 // pred_check_branch
      %14 = sbr.rel (0) target = $region5
    $region4: #{encoder_forward.1} parent=1 // pred_region
      %16 = vsyncadd [#allocation3], 0
      %s18 = sshll.u32 %s0, 4
      %s19 = int_to_ptr.hbm [resolvable:$true] %s18
      %s20 = sshll.u32 [#allocation2], 4
      %s21 = int_to_ptr.vmem [resolvable:$true] %s20
      %23 = dma.hbm_to_vmem [thread:$0]  %s19, 128, %s21, [#allocation3]
    $region5: #{encoder_forward.1} parent=1 // pred_fallthru
      _
    // Predicated region
    $region6: #{encoder_forward.1} parent=1 // pred_check
      _
    $region7: #{encoder_forward.1} parent=1 // pred_check_branch
      %25 = sbr.rel (0) target = $region9
    $region8: #{encoder_forward.1} parent=1 // pred_region
      %27 = vsyncadd [#allocation5], 0
      %s28 = sshll.u32 %s1, 4
      %s29 = int_to_ptr.hbm [resolvable:$true] %s28
      %s30 = sshll.u32 [#allocation4], 4
      %s31 = int_to_ptr.vmem [resolvable:$true] %s30
      %36 = dma.hbm_to_vmem [thread:$0]  %s29, 256, %s31, [#allocation5], 64, 64, 4
    $region9: #{encoder_forward.1} parent=1 // pred_fallthru
      _
    // Predicated region
    $region10: #{encoder_forward.1} parent=1 // pred_check
      _
    $region11: #{encoder_forward.1} parent=1 // pred_check_branch
      %38 = sbr.rel (0) target = $region13
    $region12: #{encoder_forward.1} parent=1 // pred_region
      %40 = vsyncadd [#allocation5], 0
      %s42 = sshll.u32 %s2, 4
      %s43 = int_to_ptr.hbm [resolvable:$true] %s42
      %s44 = sshll.u32 [#allocation6], 4
      %s45 = int_to_ptr.vmem [resolvable:$true] %s44
      %47 = dma.hbm_to_vmem [thread:$0]  %s43, 16, %s45, [#allocation5]
    $region13: #{encoder_forward.1} parent=1 // pred_fallthru
      _
    // Predicated region
    $region14: #{encoder_forward.1} parent=1 // pred_check
      _
    $region15: #{encoder_forward.1} parent=1 // pred_check_branch
      %49 = sbr.rel (0) target = $region17
    $region16: #{encoder_forward.1} parent=1 // pred_region
      %51 = vsyncadd [#allocation8], 0
      %s52 = sshll.u32 %s3, 4
      %s53 = int_to_ptr.hbm [resolvable:$true] %s52
      %s54 = sshll.u32 [#allocation7], 4
      %s55 = int_to_ptr.vmem [resolvable:$true] %s54
      %60 = dma.hbm_to_vmem [thread:$0]  %s53, 1024, %s55, [#allocation8], 64, 64, 4
    $region17: #{encoder_forward.1} parent=1 // pred_fallthru
      _
    // Predicated region
    $region18: #{encoder_forward.1} parent=1 // pred_check
      _
    $region19: #{encoder_forward.1} parent=1 // pred_check_branch
      %62 = sbr.rel (0) target = $region21
    $region20: #{encoder_forward.1} parent=1 // pred_region
      _
    $region21: #{encoder_forward.1} parent=1 // pred_fallthru
      _
    // Predicated region
    $region22: #{encoder_forward.1} parent=1 // pred_check
      _
    $region23: #{encoder_forward.1} parent=1 // pred_check_branch
      %64 = sbr.rel (0) target = $region25
    $region24: #{encoder_forward.1} parent=1 // pred_region
      %66 = dma.done [#allocation3], 128
    $region25: #{encoder_forward.1} parent=1 // pred_fallthru
      _
    // Predicated region
    $region26: #{encoder_forward.1} parent=1 // pred_check
      _
    $region27: #{encoder_forward.1} parent=1 // pred_check_branch
      %68 = sbr.rel (0) target = $region29
    $region28: #{encoder_forward.1} parent=1 // pred_region
      %70 = dma.done [#allocation5], 256
    $region29: #{encoder_forward.1} parent=1 // pred_fallthru
      _
    // Predicated region
    $region30: #{encoder_forward.1} parent=1 // pred_check
      _
    $region31: #{encoder_forward.1} parent=1 // pred_check_branch
      %72 = sbr.rel (0) target = $region33
    $region32: #{encoder_forward.1} parent=1 // pred_region
      %74 = dma.done [#allocation5], 16
    $region33: #{encoder_forward.1} parent=1 // pred_fallthru
      _
    // Predicated region
    $region34: #{encoder_forward.1} parent=1 // pred_check
      _
    $region35: #{encoder_forward.1} parent=1 // pred_check_branch
      %76 = sbr.rel (0) target = $region37
    $region36: #{encoder_forward.1} parent=1 // pred_region
      %78 = dma.done [#allocation8], 1024
    $region37: #{encoder_forward.1} parent=1 // pred_fallthru
      _
    %v80 = vld [vmem:[#allocation2] sm:$0xff]
    %v81 = vpack.c.bf16 %v80, %v80
    %v82 = vld [vmem:[#allocation4] sm:$0xf]
    %v83 = vld [vmem:[#allocation4 + $0x4] sm:$0xf]
    %v84 = vld [vmem:[#allocation4 + $0x8] sm:$0xf]
    %v85 = vld [vmem:[#allocation4 + $0xc] sm:$0xf]
    %v86 = vld [vmem:[#allocation6] sm:$0x1]
    %v88 = vperm.slane %v86, 0
    %v94 = vunpack.c.l.b16 %v82
    %v95 = vunpack.c.l.b16 %v83
    %v96 = vunpack.c.l.b16 %v84
    %v97 = vunpack.c.l.b16 %v85
    %v98 = vpack.c.b16 %v95, %v94
    %v99 = vpack.c.b16 %v97, %v96
    %vm102 = vcmask 261120
    %v104 = vsel %vm102, %v81, 0
    %106 = vmatpush.bf16.msra.mxu0 0
    %107 = vmatpush.bf16.msra.mxu0 0
    %108 = vmatpush.bf16.msra.mxu0 0
    %109 = vmatpush.bf16.msra.mxu0 0
    %110 = vmatpush.bf16.msra.mxu0 0
    %111 = vmatpush.bf16.msra.mxu0 0
    %112 = vmatpush.bf16.msra.mxu0 %v99
    %113 = vmatpush.bf16.msra.mxu0 %v98
    %114 = vmatmul.bf16.gmra.mxu0 %v104
    %v115 = vpop.f32.mrf.mxu0
    %v116 = vadd.f32 %v88, %v115
    %v117 = vpop.f32.mrf.mxu0
    %118 = vdwg.mxu0
    %v119 = vmax.f32 %v116, 0.0
    %v120 = vpack.c.bf16 %v119, %v119
    %v121 = vld [vmem:[#allocation7] sm:$0xf]
    %v122 = vld [vmem:[#allocation7 + $0x4] sm:$0xf]
    %v123 = vld [vmem:[#allocation7 + $0x8] sm:$0xf]
    %v124 = vld [vmem:[#allocation7 + $0xc] sm:$0xf]
    %v125 = vld [vmem:[#allocation7 + $0x10] sm:$0xf]
    %v126 = vld [vmem:[#allocation7 + $0x14] sm:$0xf]
    %v127 = vld [vmem:[#allocation7 + $0x18] sm:$0xf]
    %v128 = vld [vmem:[#allocation7 + $0x1c] sm:$0xf]
    %v129 = vld [vmem:[#allocation7 + $0x20] sm:$0xf]
    %v130 = vld [vmem:[#allocation7 + $0x24] sm:$0xf]
    %v131 = vld [vmem:[#allocation7 + $0x28] sm:$0xf]
    %v132 = vld [vmem:[#allocation7 + $0x2c] sm:$0xf]
    %v133 = vld [vmem:[#allocation7 + $0x30] sm:$0xf]
    %v134 = vld [vmem:[#allocation7 + $0x34] sm:$0xf]
    %v135 = vld [vmem:[#allocation7 + $0x38] sm:$0xf]
    %v136 = vld [vmem:[#allocation7 + $0x3c] sm:$0xf]
    %v137 = vld [vmem:[%s4] sm:$0x1]
    %v139 = vperm.slane %v137, 0
    %v157 = vunpack.c.l.b16 %v121
    %v158 = vunpack.c.l.b16 %v122
    %v159 = vunpack.c.l.b16 %v123
    %v160 = vunpack.c.l.b16 %v124
    %v161 = vunpack.c.l.b16 %v125
    %v162 = vunpack.c.l.b16 %v126
    %v163 = vunpack.c.l.b16 %v127
    %v164 = vunpack.c.l.b16 %v128
    %v165 = vunpack.c.l.b16 %v129
    %v166 = vunpack.c.l.b16 %v130
    %v167 = vunpack.c.l.b16 %v131
    %v168 = vunpack.c.l.b16 %v132
    %v169 = vunpack.c.l.b16 %v133
    %v170 = vunpack.c.l.b16 %v134
    %v171 = vunpack.c.l.b16 %v135
    %v172 = vunpack.c.l.b16 %v136
    %v173 = vpack.c.b16 %v158, %v157
    %v174 = vpack.c.b16 %v160, %v159
    %v175 = vpack.c.b16 %v162, %v161
    %v176 = vpack.c.b16 %v164, %v163
    %v177 = vpack.c.b16 %v166, %v165
    %v178 = vpack.c.b16 %v168, %v167
    %v179 = vpack.c.b16 %v170, %v169
    %v180 = vpack.c.b16 %v172, %v171
    %189 = vmatpush.bf16.msra.mxu0 %v180
    %190 = vmatpush.bf16.msra.mxu0 %v179
    %191 = vmatpush.bf16.msra.mxu0 %v178
    %192 = vmatpush.bf16.msra.mxu0 %v177
    %193 = vmatpush.bf16.msra.mxu0 %v176
    %194 = vmatpush.bf16.msra.mxu0 %v175
    %195 = vmatpush.bf16.msra.mxu0 %v174
    %196 = vmatpush.bf16.msra.mxu0 %v173
    %197 = vmatmul.bf16.gmra.mxu0 %v120
    %v198 = vpop.f32.mrf.mxu0
    %v199 = vadd.f32 %v139, %v198
    %v200 = vpop.f32.mrf.mxu0
    %201 = vdwg.mxu0
    %202 = vst [vmem:[%s5] sm:$0xff] %v199
    // Predicated region
    $region38: #{encoder_forward.1} parent=1 // pred_check
      _
    $region39: #{encoder_forward.1} parent=1 // pred_check_branch
      %204 = sbr.rel (0) target = $region41
    $region40: #{encoder_forward.1} parent=1 // pred_region
      _
    $region41: #{encoder_forward.1} parent=1 // pred_fallthru
      _
    // Predicated region
    $region42: #{encoder_forward.1} parent=1 // pred_check
      _
    $region43: #{encoder_forward.1} parent=1 // pred_check_branch
      %206 = sbr.rel (0) target = $region45
    $region44: #{encoder_forward.1} parent=1 // pred_region
      _
    $region45: #{encoder_forward.1} parent=1 // pred_fallthru
      _
    %207 = vsyncpa [#allocation3], 1
    %208 = vsyncpa [#allocation5], 1
    %209 = vsyncpa [#allocation8], 1

</llo_original>
